<compile_context>
chip_gen: v7x
topology: tpu7x:2x2x1
jax: 0.10.0
libtpu: 0.0.40
codegen_flags: <defaults>
</compile_context>

<pallas_src>
import functools
import math

import jax
import jax.numpy as jnp
from jax.experimental import pallas as pl
from jax.experimental.pallas import tpu as pltpu


def _cdiv(a, b):
    return -(-a // b)


def _round_up(x, m):
    return _cdiv(x, m) * m


def _round_down(x, m):
    return (x // m) * m


# ----------------------------------------------------------------------------
# Pallas kernel: LayerNorm over the last axis of a (block_rows, F) tile
# ----------------------------------------------------------------------------
def _layernorm_kernel(x_ref, gamma_ref, beta_ref, o_ref, *, eps, feat):
    x = x_ref[...].astype(jnp.float32)              # (block_rows, F)
    g = gamma_ref[...].astype(jnp.float32)          # (1, F)
    b = beta_ref[...].astype(jnp.float32)           # (1, F)

    mean = jnp.mean(x, axis=-1, keepdims=True)      # (block_rows, 1)
    diff = x - mean
    # PyTorch Tensor.std() defaults to the unbiased estimator (divide by N-1).
    denom = max(feat - 1, 1)                        # guard feat == 1
    var = jnp.sum(diff * diff, axis=-1, keepdims=True) * (1.0 / denom)
    std = jnp.sqrt(var)
    inv = 1.0 / (std + eps)                         # eps added to std (module semantics)
    o_ref[...] = (g * (diff * inv) + b).astype(o_ref.dtype)


# ----------------------------------------------------------------------------
# Block-size selection: bandwidth-sized blocks, VMEM-safe, >= 2 grid steps
# ----------------------------------------------------------------------------
def _choose_block_rows(rows, feat, itemsize, *, max_block_rows=4096,
                       vmem_budget_bytes=16 << 20, target_steps=8,
                       bw_block_bytes=512 << 10):
    # Sublane packing: 4-byte dtypes -> 8 rows, 2-byte -> 16, 1-byte -> 32.
    sub = 8 * max(4 // max(itemsize, 1), 1)

    # (a) VMEM cap: (x-in + out) x 2 pipeline buffers of (block_rows, feat)
    #     must stay well under the scoped limit on every generation (incl. v7x).
    cap_vmem = max(_round_down(vmem_budget_bytes // (4 * feat * itemsize), sub), sub)
    br = min(_round_up(max_block_rows, sub), cap_vmem)

    # (b) Aim for ~target_steps grid steps (lets v7x shard the "parallel" axis
    #     across its 2 TensorCores) but never shrink a block below ~512 KiB,
    #     where HBM streaming falls off the roofline.
    bw_rows = max(_round_down(bw_block_bytes // (feat * itemsize), sub), sub)
    steps_rows = max(_round_down(_cdiv(rows, target_steps), sub), sub)
    br = min(br, max(steps_rows, bw_rows))

    # (c) Always give the second TensorCore work when the row count allows:
    #     guarantee >= 2 grid steps.
    two_step_rows = max(_round_up(_cdiv(rows, 2), sub), sub)
    br = min(br, two_step_rows)

    return max(_round_down(br, sub), sub)


# ----------------------------------------------------------------------------
# Wrapper: flatten leading dims -> rows, tile rows, full feature dim per block
# ----------------------------------------------------------------------------
def layer_norm(x, gamma, beta, *, eps=1e-6, block_rows=None):
    *lead, feat = x.shape
    rows = math.prod(lead) if lead else 1
    x2 = x.reshape(rows, feat)

    if block_rows is None:
        block_rows = _choose_block_rows(rows, feat, jnp.dtype(x.dtype).itemsize)

    # Ragged last block is handled by Pallas: reads are padded (garbage rows
    # only affect themselves since the reduction is per-row) and out-of-bounds
    # writes are dropped — no wrapper-side pad/slice, no extra HBM traffic.
    grid = _cdiv(rows, block_rows)

    out = pl.pallas_call(
        functools.partial(_layernorm_kernel, eps=eps, feat=feat),
        out_shape=jax.ShapeDtypeStruct((rows, feat), x.dtype),
        grid=(grid,),
        in_specs=[
            pl.BlockSpec((block_rows, feat), lambda i: (i, 0)),
            pl.BlockSpec((1, feat), lambda i: (0, 0)),   # gamma (shared block)
            pl.BlockSpec((1, feat), lambda i: (0, 0)),   # beta
        ],
        out_specs=pl.BlockSpec((block_rows, feat), lambda i: (i, 0)),
        compiler_params=pltpu.CompilerParams(
            dimension_semantics=("parallel",),           # v7x: shard steps over 2 TCs
        ),
    )(x2, gamma.reshape(1, feat), beta.reshape(1, feat))

    return out.reshape(*lead, feat)


# ----------------------------------------------------------------------------
# Demo / self-check
# ----------------------------------------------------------------------------
def _ref_layernorm(x, gamma, beta, eps):
    xf = x.astype(jnp.float32)
    mean = jnp.mean(xf, axis=-1, keepdims=True)
    std = jnp.std(xf, axis=-1, keepdims=True, ddof=1)
    return gamma.astype(jnp.float32) * (xf - mean) / (std + eps) + beta.astype(jnp.float32)


if __name__ == "__main__":
    key = jax.random.PRNGKey(0)
    kx, kg, kb, kr = jax.random.split(key, 4)

    # Shapes consistent with the GRU model this LayerNorm sits in:
    # batch=2, seq=8, hidden(features)=128 (lane-aligned last dim).
    N, S, F = 2, 8, 128
    eps = 1e-6

    x = jax.random.normal(kx, (N, S, F), jnp.float32)
    gamma = 1.0 + 0.1 * jax.random.normal(kg, (F,), jnp.float32)
    beta = 0.1 * jax.random.normal(kb, (F,), jnp.float32)

    ln = jax.jit(functools.partial(layer_norm, eps=eps))

    # --- f32 path ---
    out = jax.block_until_ready(ln(x, gamma, beta))
    assert out.shape == (N, S, F), out.shape
    err = float(jnp.max(jnp.abs(out - _ref_layernorm(x, gamma, beta, eps))))
    if err > 1e-5:
        raise AssertionError(f"LayerNorm f32 mismatch: max abs err = {err}")

    # --- ragged rows (rows not a multiple of the block): exercises masked last block ---
    x_r = jax.random.normal(kr, (3, 7, F), jnp.float32)
    out_r = jax.block_until_ready(ln(x_r, gamma, beta))
    err_r = float(jnp.max(jnp.abs(out_r - _ref_layernorm(x_r, gamma, beta, eps))))
    if err_r > 1e-5:
        raise AssertionError(f"LayerNorm ragged mismatch: max abs err = {err_r}")

    # --- bf16 activations at the boundary (math stays f32 in-kernel) ---
    x_bf = x.astype(jnp.bfloat16)
    out_bf = jax.block_until_ready(ln(x_bf, gamma, beta))
    assert out_bf.dtype == jnp.bfloat16
    err_bf = float(jnp.max(jnp.abs(out_bf.astype(jnp.float32)
                                   - _ref_layernorm(x_bf, gamma, beta, eps))))
    if err_bf > 6e-2:
        raise AssertionError(f"LayerNorm bf16 mismatch: max abs err = {err_bf}")

    print("KERNEL_OK")
</pallas_src>

<mosaic_0001>
module attributes {stable_mosaic.version = 11 : i64} {
  func.func @_layernorm_kernel(%arg0: i32, %arg1: memref<8x128xf32, #tpu.memory_space<vmem>>, %arg2: memref<1x128xf32, #tpu.memory_space<vmem>>, %arg3: memref<1x128xf32, #tpu.memory_space<vmem>>, %arg4: memref<8x128xf32, #tpu.memory_space<vmem>>) attributes {dimension_semantics = [#tpu.dimension_semantics<parallel>], iteration_bounds = array<i64: 2>, scalar_prefetch = 0 : i64, scratch_operands = 0 : i64, tpu.core_type = #tpu.core_type<tc>, window_params = [{transform_indices = @transform_0, window_bounds = array<i64: 8, 128>}, {pipeline_mode = #tpu.pipeline_mode<synchronous>, transform_indices = @transform_1, window_bounds = array<i64: 1, 128>}, {pipeline_mode = #tpu.pipeline_mode<synchronous>, transform_indices = @transform_2, window_bounds = array<i64: 1, 128>}, {transform_indices = @transform_3, window_bounds = array<i64: 8, 128>}]} {
    %c0 = arith.constant 0 : index
    %c0_0 = arith.constant 0 : index
    %0 = vector.load %arg1[%c0, %c0_0] : memref<8x128xf32, #tpu.memory_space<vmem>>, vector<8x128xf32>
    %c0_1 = arith.constant 0 : index
    %c0_2 = arith.constant 0 : index
    %1 = vector.load %arg2[%c0_1, %c0_2] : memref<1x128xf32, #tpu.memory_space<vmem>>, vector<1x128xf32>
    %c0_3 = arith.constant 0 : index
    %c0_4 = arith.constant 0 : index
    %2 = vector.load %arg3[%c0_3, %c0_4] : memref<1x128xf32, #tpu.memory_space<vmem>>, vector<1x128xf32>
    %cst = arith.constant dense<0.000000e+00> : vector<8xf32>
    %3 = vector.multi_reduction <add>, %0, %cst [1] : vector<8x128xf32> to vector<8xf32>
    %4 = vector.shape_cast %3 : vector<8xf32> to vector<8x1xf32>
    %cst_5 = arith.constant 1.280000e+02 : f32
    %5 = vector.broadcast %cst_5 : f32 to vector<8x1xf32>
    %6 = arith.divf %4, %5 : vector<8x1xf32>
    %7 = vector.broadcast %6 : vector<8x1xf32> to vector<8x128xf32>
    %8 = arith.subf %0, %7 : vector<8x128xf32>
    %9 = arith.mulf %8, %8 : vector<8x128xf32>
    %cst_6 = arith.constant dense<0.000000e+00> : vector<8xf32>
    %10 = vector.multi_reduction <add>, %9, %cst_6 [1] : vector<8x128xf32> to vector<8xf32>
    %11 = vector.shape_cast %10 : vector<8xf32> to vector<8x1xf32>
    %cst_7 = arith.constant 0.00787401571 : f32
    %12 = vector.broadcast %cst_7 : f32 to vector<8x1xf32>
    %13 = arith.mulf %11, %12 : vector<8x1xf32>
    %14 = math.sqrt %13 : vector<8x1xf32>
    %cst_8 = arith.constant 9.99999997E-7 : f32
    %15 = vector.broadcast %cst_8 : f32 to vector<8x1xf32>
    %16 = arith.addf %14, %15 : vector<8x1xf32>
    %cst_9 = arith.constant 1.000000e+00 : f32
    %17 = vector.broadcast %cst_9 : f32 to vector<8x1xf32>
    %18 = arith.divf %17, %16 : vector<8x1xf32>
    %19 = vector.broadcast %18 : vector<8x1xf32> to vector<8x128xf32>
    %20 = arith.mulf %8, %19 : vector<8x128xf32>
    %21 = vector.broadcast %1 : vector<1x128xf32> to vector<8x128xf32>
    %22 = arith.mulf %21, %20 : vector<8x128xf32>
    %23 = vector.broadcast %2 : vector<1x128xf32> to vector<8x128xf32>
    %24 = arith.addf %22, %23 : vector<8x128xf32>
    %c0_10 = arith.constant 0 : index
    %c0_11 = arith.constant 0 : index
    %25 = vector.load %arg4[%c0_10, %c0_11] : memref<8x128xf32, #tpu.memory_space<vmem>>, vector<8x128xf32>
    tpu.vector_store %arg4[%c0_10, %c0_11], %24 {strides = array<i32>} : memref<8x128xf32, #tpu.memory_space<vmem>>, vector<8x128xf32>,
    return
  }
  func.func @transform_0(%arg0: i32) -> (i32, i32) {
    %c0_i32 = arith.constant 0 : i32
    %c0_i32_0 = arith.constant 0 : i32
    return %arg0, %c0_i32 : i32, i32
  }
  func.func @transform_1(%arg0: i32) -> (i32, i32) {
    %c0_i32 = arith.constant 0 : i32
    %c0_i32_0 = arith.constant 0 : i32
    %c0_i32_1 = arith.constant 0 : i32
    return %c0_i32, %c0_i32_0 : i32, i32
  }
  func.func @transform_2(%arg0: i32) -> (i32, i32) {
    %c0_i32 = arith.constant 0 : i32
    %c0_i32_0 = arith.constant 0 : i32
    %c0_i32_1 = arith.constant 0 : i32
    return %c0_i32, %c0_i32_0 : i32, i32
  }
  func.func @transform_3(%arg0: i32) -> (i32, i32) {
    %c0_i32 = arith.constant 0 : i32
    %c0_i32_0 = arith.constant 0 : i32
    return %arg0, %c0_i32 : i32, i32
  }
}

</mosaic_0001>

<llo_original>
// kernel: layer_norm.1
$region0: #{layer_norm.1}
  #allocation0 [shape = 'u32[]', space=smem, size = 0x4, offset = 0x4, fixed_abs, tag = 'smem constant byte address 0x4 - core index']
  #allocation1 [shape = 'u32[144,128]{1,0:T(1,128)}', space=vmem, size = 0x12000, scoped, tag = 'internal scratch']
  %s0 = inlined_call_operand.hbm [shape: f32[16,128], index: 0, kind: input, shape index: {}]
  %s1 = inlined_call_operand.vmem [shape: f32[1,128], index: 1, kind: input, shape index: {}]
  %s2 = inlined_call_operand.vmem [shape: f32[1,128], index: 2, kind: input, shape index: {}]
  %s3 = inlined_call_operand.hbm [shape: f32[16,128], index: 3, kind: output, shape index: {}]
  %s4 = sld [smem:[#allocation0]]
  $region49: #{layer_norm.1} parent=0
    _
  %s6 = ssub.s32 1, %s4
  %s7 = scalar_select 0, %s6, %s4
  $region1: #{layer_norm.1} parent=0
    #allocation2 [shape = 'u8[8192]{0}', space=vmem, size = 0x2000, scoped, tag = 'input window, operand 0']
    #allocation3 [shape = 's32[2]{0}', space=sflag, size = 0x8, scoped, tag = 'scoped memory for layer_norm.1']
    #allocation4 [shape = 's32[2]{0}', space=sflag, size = 0x8, scoped, tag = 'scoped memory for layer_norm.1']
    #allocation5 [shape = 'u8[8192]{0}', space=vmem, size = 0x2000, scoped, tag = 'output window, operand 0']
    %8 = vsyncpa [#allocation3], 0
    %s9 = scalar_lea.sflag [#allocation3], 1
    %10 = vsyncpa %s9, 0
    %11 = vsyncpa [#allocation4], 0
    %s12 = scalar_lea.sflag [#allocation4], 1
    %13 = vsyncpa %s12, 0
    loop: start=0, step=1, limit=4
    $region2: #{layer_norm.1} parent=1 // loop_pre_header
      _
    $region3: #{layer_norm.1} parent=1 // loop_header
      %s15 = sphi 0, %s19
      %p16 = scmp.ge.s32.totalorder %s15, 4
      %s25 = sphi 0, %s27
      %s28 = sphi 0, %s25
      %s29 = sphi 0, %s28
      %s45 = sphi 0, %s29
      %s49 = sphi 0, %s49
      %s51 = sphi 0, %s49
      %s52 = sphi 0, %s51
      %s66 = sphi 0, %s52
      %s70 = sphi 0, %s70
      %s72 = sphi 0, %s70
      %s73 = sphi 0, %s72
      %s87 = sphi 0, %s73
      %s93 = sphi 0, %s95
      %s96 = sphi 0, %s93
      %s97 = sphi 0, %s96
      %s113 = sphi 0, %s97
    $region4: #{layer_norm.1} parent=1 // loop_header_branch
      %18 = sbr.rel (%p16) target = $region8
    $region5: #{layer_norm.1} parent=1 // loop_body
      %s20 = ssub.s32 %s15, 1
      %s21 = ssub.s32 %s15, 2
      %s22 = sadd.s32 %s15, 1
      %s23 = ssub.s32 %s15, %s22
      %p24 = scmp.eq.s32.totalorder %s23, 0
      %s26 = sadd.s32 %s25, 1
      %s27 = scalar_select %p24, %s25, %s26
      %p30 = pneg %p24
      %p31 = scmp.eq.s32.totalorder %s15, 1
      %p32 = por %p30, %p31
      %p33 = scmp.ne.s32.totalorder %s25, %s28
      %p34 = scmp.eq.s32.totalorder %s15, 0
      %p35 = por %p33, %p34
      %p36 = scmp.ne.s32.totalorder %s25, %s28
      %p37 = scmp.eq.s32.totalorder %s20, 1
      %p38 = por %p36, %p37
      %p39 = scmp.ne.s32.totalorder %s28, %s29
      %p40 = scmp.eq.s32.totalorder %s20, 0
      %p41 = por %p39, %p40
      %p42 = scmp.ne.s32.totalorder %s28, %s29
      %p43 = scmp.eq.s32.totalorder %s21, 1
      %p44 = por %p42, %p43
      %p46 = scmp.ne.s32.totalorder %s29, %s45
      %p47 = scmp.eq.s32.totalorder %s21, 0
      %p48 = por %p46, %p47
      %s50 = sadd.s32 %s49, 1
      %p53 = scmp.eq.s32.totalorder %s15, 1
      %p54 = scmp.ne.s32.totalorder %s49, %s51
      %p55 = scmp.eq.s32.totalorder %s15, 0
      %p56 = por %p54, %p55
      %p57 = scmp.ne.s32.totalorder %s49, %s51
      %p58 = scmp.eq.s32.totalorder %s20, 1
      %p59 = por %p57, %p58
      %p60 = scmp.ne.s32.totalorder %s51, %s52
      %p61 = scmp.eq.s32.totalorder %s20, 0
      %p62 = por %p60, %p61
      %p63 = scmp.ne.s32.totalorder %s51, %s52
      %p64 = scmp.eq.s32.totalorder %s21, 1
      %p65 = por %p63, %p64
      %p67 = scmp.ne.s32.totalorder %s52, %s66
      %p68 = scmp.eq.s32.totalorder %s21, 0
      %p69 = por %p67, %p68
      %s71 = sadd.s32 %s70, 1
      %p74 = scmp.eq.s32.totalorder %s15, 1
      %p75 = scmp.ne.s32.totalorder %s70, %s72
      %p76 = scmp.eq.s32.totalorder %s15, 0
      %p77 = por %p75, %p76
      %p78 = scmp.ne.s32.totalorder %s70, %s72
      %p79 = scmp.eq.s32.totalorder %s20, 1
      %p80 = por %p78, %p79
      %p81 = scmp.ne.s32.totalorder %s72, %s73
      %p82 = scmp.eq.s32.totalorder %s20, 0
      %p83 = por %p81, %p82
      %p84 = scmp.ne.s32.totalorder %s72, %s73
      %p85 = scmp.eq.s32.totalorder %s21, 1
      %p86 = por %p84, %p85
      %p88 = scmp.ne.s32.totalorder %s73, %s87
      %p89 = scmp.eq.s32.totalorder %s21, 0
      %p90 = por %p88, %p89
      %s91 = ssub.s32 %s15, %s22
      %p92 = scmp.eq.s32.totalorder %s91, 0
      %s94 = sadd.s32 %s93, 1
      %s95 = scalar_select %p92, %s93, %s94
      %p98 = pneg %p92
      %p99 = scmp.eq.s32.totalorder %s15, 1
      %p100 = por %p98, %p99
      %p101 = scmp.ne.s32.totalorder %s93, %s96
      %p102 = scmp.eq.s32.totalorder %s15, 0
      %p103 = por %p101, %p102
      %p104 = scmp.ne.s32.totalorder %s93, %s96
      %p105 = scmp.eq.s32.totalorder %s20, 1
      %p106 = por %p104, %p105
      %p107 = scmp.ne.s32.totalorder %s96, %s97
      %p108 = scmp.eq.s32.totalorder %s20, 0
      %p109 = por %p107, %p108
      %p110 = scmp.ne.s32.totalorder %s96, %s97
      %p111 = scmp.eq.s32.totalorder %s21, 1
      %p112 = por %p110, %p111
      %p114 = scmp.ne.s32.totalorder %s97, %s113
      %p115 = scmp.eq.s32.totalorder %s21, 0
      %p116 = por %p114, %p115
      %p117 = scmp.le.s32.totalorder 1, %s15
      %p118 = scmp.lt.s32.totalorder %s15, 3
      %p119 = pnand %p117, %p118
      %p120 = pneg %p119
      // Predicated region
      $region9: #{layer_norm.1} parent=5 // pred_check
        _
      $region10: #{layer_norm.1} parent=5 // pred_check_branch
        %122 = sbr.rel (%p119) target = $region12
      $region11: #{layer_norm.1} parent=5 // pred_region
        %s123 = ssub.s32 %s15, 1
        // Predicated region
        $region13: #{layer_norm.1} parent=11 // pred_check
          %p124 = pneg %p62
        $region14: #{layer_norm.1} parent=11 // pred_check_branch
          %126 = sbr.rel (%p124) target = $region16
        $region15: #{layer_norm.1} parent=11 // pred_region
          _
        $region16: #{layer_norm.1} parent=11 // pred_fallthru
          _
        // Predicated region
        $region17: #{layer_norm.1} parent=11 // pred_check
          %p127 = pneg %p83
        $region18: #{layer_norm.1} parent=11 // pred_check_branch
          %129 = sbr.rel (%p127) target = $region20
        $region19: #{layer_norm.1} parent=11 // pred_region
          _
        $region20: #{layer_norm.1} parent=11 // pred_fallthru
          _
      $region12: #{layer_norm.1} parent=5 // pred_fallthru
        _
      %p130 = scmp.lt.s32.totalorder %s15, 2
      // Predicated region
      $region21: #{layer_norm.1} parent=5 // pred_check
        %p131 = pneg %p130
      $region22: #{layer_norm.1} parent=5 // pred_check_branch
        %133 = sbr.rel (%p131) target = $region24
      $region23: #{layer_norm.1} parent=5 // pred_region
        // Predicated region
        $region25: #{layer_norm.1} parent=23 // pred_check
          %p134 = pneg %p35
        $region26: #{layer_norm.1} parent=23 // pred_check_branch
          %136 = sbr.rel (%p134) target = $region28
        $region27: #{layer_norm.1} parent=23 // pred_region
          %s137 = sand.u32 %s25, 1
          %s138 = scalar_lea.sflag [#allocation3], %s137
          %s139 = sand.u32 %s25, 1
          %s140 = smul.addr %s139, 8
          %s141 = scalar_lea.vmem [#allocation2], %s140
          %s143 = ssub.s32 128, 128
          %144 = vsyncadd %s138, %s143
          %s145 = smul.addr %s15, 128
          %s146 = scalar_lea.hbm %s0, %s145
          %s148 = sshll.u32 %s141, 4
          %s149 = int_to_ptr.vmem [resolvable:$true] %s148
          %151 = dma.hbm_to_vmem [thread:$0]  %s146, 128, %s149, %s138
        $region28: #{layer_norm.1} parent=23 // pred_fallthru
          _
      $region24: #{layer_norm.1} parent=5 // pred_fallthru
        _
      %p152 = scmp.le.s32.totalorder 1, %s15
      %p153 = scmp.lt.s32.totalorder %s15, 3
      %p154 = pnand %p152, %p153
      %p155 = pneg %p154
      // Predicated region
      $region29: #{layer_norm.1} parent=5 // pred_check
        _
      $region30: #{layer_norm.1} parent=5 // pred_check_branch
        %157 = sbr.rel (%p154) target = $region32
      $region31: #{layer_norm.1} parent=5 // pred_region
        %s158 = ssub.s32 %s15, 1
        %s159 = sand.u32 %s28, 1
        %s160 = scalar_lea.sflag [#allocation3], %s159
        %s161 = sand.u32 %s28, 1
        %s162 = smul.addr %s161, 8
        %s163 = scalar_lea.vmem [#allocation2], %s162
        // Predicated region
        $region33: #{layer_norm.1} parent=31 // pred_check
          %p164 = pneg %p41
        $region34: #{layer_norm.1} parent=31 // pred_check_branch
          %166 = sbr.rel (%p164) target = $region36
        $region35: #{layer_norm.1} parent=31 // pred_region
          %167 = dma.done %s160, 128
        $region36: #{layer_norm.1} parent=31 // pred_fallthru
          _
        %s168 = sand.u32 %s28, 1
        %s169 = scalar_lea.sflag [#allocation3], %s168
        %s170 = sand.u32 %s28, 1
        %s171 = smul.addr %s170, 8
        %s172 = scalar_lea.vmem [#allocation2], %s171
        %p173 = pneg %p41
        %p174 = pneg %p38
        %p175 = pneg %p62
        %p176 = pneg %p59
        %p177 = pneg %p83
        %p178 = pneg %p80
        %p179 = pneg %p109
        %p180 = pneg %p106
        %s181 = sand.u32 %s96, 1
        %s182 = scalar_lea.sflag [#allocation4], %s181
        %s183 = sand.u32 %s96, 1
        %s184 = smul.addr %s183, 8
        %s185 = scalar_lea.vmem [#allocation5], %s184
        %v186 = vld [vmem:[%s163] sm:$0xff]
        %v187 = vld [vmem:[%s1] sm:$0x1]
        %v188 = vld [vmem:[%s2] sm:$0x1]
        %189 = vadd.xlane.f32.xlu0 %v186
        %v190 = vpop.xlane.xlu0 %189
        %v191 = vrcp.pop 128.0
        %v192 = vmul.f32 %v190, %v191
        %v193 = vsub.f32 %v186, %v192
        %v194 = vmul.f32 %v193, %v193
        %195 = vadd.xlane.f32.xlu0 %v194
        %v196 = vpop.xlane.xlu0 %195
        %v197 = vmul.f32 %v196, 0.007874016
        %v198 = vrsqrt.pop %v197
        %v199 = vmul.f32 %v197, %v198
        %vm200 = vcmp.eq.f32.partialorder %v197, inf
        %v201 = vsel %vm200, %v197, %v199
        %vm202 = vcmp.eq.f32.partialorder %v197, 0.0
        %v203 = vand.u32 %v197, 2147483648
        %v204 = vsel %vm202, %v203, %v201
        %v205 = vadd.f32 %v204, 1e-06
        %v206 = vrcp.pop %v205
        %v207 = vmul.f32 1.0, %v206
        %v208 = vmul.f32 %v193, %v207
        %v210 = vlaneseq
        %v211 = vshrl.u32 %v210, 7
        %v212 = vsub.s32 0, %v211
        %v213 = vrot.slane %v187, %v212
        %v215 = vmul.f32 %v213, %v208
        %v217 = vlaneseq
        %v218 = vshrl.u32 %v217, 7
        %v219 = vsub.s32 0, %v218
        %v220 = vrot.slane %v188, %v219
        %v222 = vadd.f32 %v215, %v220
        %223 = vst [vmem:[%s185] sm:$0xff] %v222
        %s224 = sand.u32 %s96, 1
        %s225 = scalar_lea.sflag [#allocation4], %s224
        %s226 = sand.u32 %s96, 1
        %s227 = smul.addr %s226, 8
        %s228 = scalar_lea.vmem [#allocation5], %s227
        // Predicated region
        $region37: #{layer_norm.1} parent=31 // pred_check
          %p229 = pneg %p106
        $region38: #{layer_norm.1} parent=31 // pred_check_branch
          %231 = sbr.rel (%p229) target = $region40
        $region39: #{layer_norm.1} parent=31 // pred_region
          %s233 = ssub.s32 128, 128
          %234 = vsyncadd %s225, %s233
          %s235 = smul.addr %s20, 128
          %s236 = scalar_lea.hbm %s3, %s235
          %s238 = sshll.u32 %s228, 4
          %s239 = int_to_ptr.vmem [resolvable:$true] %s238
          %241 = dma.vmem_to_hbm [thread:$0]  %s239, 128, %s236, %s225
        $region40: #{layer_norm.1} parent=31 // pred_fallthru
          _
      $region32: #{layer_norm.1} parent=5 // pred_fallthru
        _
      %p242 = scmp.le.s32.totalorder 2, %s15
      // Predicated region
      $region41: #{layer_norm.1} parent=5 // pred_check
        %p243 = pneg %p242
      $region42: #{layer_norm.1} parent=5 // pred_check_branch
        %245 = sbr.rel (%p243) target = $region44
      $region43: #{layer_norm.1} parent=5 // pred_region
        %s246 = ssub.s32 %s15, 2
        // Predicated region
        $region45: #{layer_norm.1} parent=43 // pred_check
          %p247 = pneg %p112
        $region46: #{layer_norm.1} parent=43 // pred_check_branch
          %249 = sbr.rel (%p247) target = $region48
        $region47: #{layer_norm.1} parent=43 // pred_region
          %s250 = sand.u32 %s97, 1
          %s251 = scalar_lea.sflag [#allocation4], %s250
          %s252 = sand.u32 %s97, 1
          %s253 = smul.addr %s252, 8
          %s254 = scalar_lea.vmem [#allocation5], %s253
          %255 = dma.done %s251, 128
        $region48: #{layer_norm.1} parent=43 // pred_fallthru
          _
      $region44: #{layer_norm.1} parent=5 // pred_fallthru
        _
    $region6: #{layer_norm.1} parent=1 // loop_footer
      %s19 = sadd.s32 1, %s15
    $region7: #{layer_norm.1} parent=1 // loop_footer_branch
      %14 = sbr.rel target = $region3
    $region8: #{layer_norm.1} parent=1 // loop_exit
      _
    %256 = vsyncpa [#allocation3], 1
    %s257 = scalar_lea.sflag [#allocation3], 1
    %258 = vsyncpa %s257, 1
    %259 = vsyncpa [#allocation4], 1
    %s260 = scalar_lea.sflag [#allocation4], 1
    %261 = vsyncpa %s260, 1

</llo_original>
